<compile_context>
chip_gen: v7x
topology: tpu7x:2x2x1
jax: 0.10.0
libtpu: 0.0.40
codegen_flags: <defaults>
</compile_context>

<pallas_src>
import jax
import jax.numpy as jnp
import numpy as np
from jax.experimental import pallas as pl
from jax.experimental.pallas import tpu as pltpu

_LANE = 128
_SUBLANE = 8


# --------------------------------------------------------------------------
# Production path: identity is free — no kernel launch, no HBM traffic.
# --------------------------------------------------------------------------
def base_net_forward(x: jax.Array) -> jax.Array:
    """Faithful BaseNet forward (identity).

    Per the perf review, the identity path is elided entirely: with zero
    compute and zero parameters, launching a copy kernel only adds 2x-size
    HBM traffic. Subclasses with real compute should build on
    `base_net_forward_pallas` below.
    """
    return x


# --------------------------------------------------------------------------
# Subclass skeleton: lane-/sublane-dense tiled Pallas pass-through.
# --------------------------------------------------------------------------
def _identity_copy_kernel(x_ref, o_ref):
    # BaseNet defines no compute; subclasses replace this body with real work
    # on the lane-dense (block_rows, cols) VMEM tile.
    o_ref[...] = x_ref[...]


def _select_budgets():
    """Per-generation (max_block_bytes, vmem_limit_bytes), sized from the chip.

    in + out, double-buffered => ~4x block must fit the scoped VMEM limit with
    headroom for compiler-internal scratch.
    """
    try:
        vmem_cap = int(pltpu.get_tpu_info().vmem_capacity_bytes)
    except Exception:
        vmem_cap = 64 * 1024 * 1024  # conservative (v7x per-TC figure)
    if vmem_cap >= 128 * 1024 * 1024:  # v5e / v6e
        return 8 * 1024 * 1024, 48 * 1024 * 1024
    return 4 * 1024 * 1024, 32 * 1024 * 1024  # v7x (64 MiB VMEM per TC)


def _lane_dense_view(total: int):
    """(rows, cols, padded_total) with cols % 128 == 0 and rows % 8 == 0."""
    for cols in (2048, 1024, 512, 256, _LANE):
        if total % cols == 0 and (total // cols) % _SUBLANE == 0:
            return total // cols, cols, total
    # Pad to a multiple of 8*128 so the view stays tiled, sublane-aligned and
    # pipelined (replaces the old single (1, total) VMEM-resident fallback).
    tile = _SUBLANE * _LANE
    padded = pl.cdiv(total, tile) * tile
    return padded // _LANE, _LANE, padded


def _pick_block_rows(rows: int, cols: int, itemsize: int, max_block_bytes: int) -> int:
    """Block rows: multiple of 8, <= max_block_bytes, prefer dividing rows,
    and give the 'parallel' grid axis >= 2 steps when possible (v7x megacore)."""
    total_groups = rows // _SUBLANE  # rows is a multiple of 8 by construction
    group_bytes = _SUBLANE * cols * itemsize
    max_groups = max(1, max_block_bytes // group_bytes)
    groups = min(total_groups, max_groups)
    if total_groups >= 2:
        groups = min(groups, pl.cdiv(total_groups, 2))
    # Prefer a nearby divisor of total_groups so the last block isn't ragged.
    for g in range(groups, max(groups - 64, 0), -1):
        if total_groups % g == 0:
            groups = g
            break
    return groups * _SUBLANE


@jax.jit
def base_net_forward_pallas(x: jax.Array) -> jax.Array:
    """Pallas skeleton for BaseNet subclasses (identity pass-through).

    Presents a lane-dense (rows % 8 == 0, cols % 128 == 0) flattened view to
    the kernel, double-buffered over a 1-D "parallel" grid, with generation-
    aware block sizing. The output aliases the flattened input buffer; keep
    that alias only while the output index_map equals the input index_map.
    """
    orig_shape = x.shape
    total = x.size
    itemsize = jnp.dtype(x.dtype).itemsize

    rows, cols, padded_total = _lane_dense_view(total)
    max_block_bytes, vmem_limit = _select_budgets()
    block_rows = _pick_block_rows(rows, cols, itemsize, max_block_bytes)
    grid = (pl.cdiv(rows, block_rows),)

    flat = x.reshape(-1)
    if padded_total != total:
        flat = jnp.pad(flat, (0, padded_total - total))
    flat2d = flat.reshape(rows, cols)

    y2d = pl.pallas_call(
        _identity_copy_kernel,
        out_shape=jax.ShapeDtypeStruct((rows, cols), x.dtype),
        grid_spec=pl.GridSpec(
            grid=grid,
            in_specs=[pl.BlockSpec((block_rows, cols), lambda i: (i, 0))],
            out_specs=pl.BlockSpec((block_rows, cols), lambda i: (i, 0)),
        ),
        # In-place on the flattened buffer: no second full-tensor HBM target.
        input_output_aliases={0: 0},
        cost_estimate=pl.CostEstimate(
            flops=0,
            transcendentals=0,
            bytes_accessed=2 * padded_total * itemsize,
        ),
        compiler_params=pltpu.CompilerParams(
            dimension_semantics=("parallel",),  # shardable across v7x's 2 TCs
            vmem_limit_bytes=vmem_limit,
        ),
    )(flat2d)

    y_flat = y2d.reshape(-1)
    if padded_total != total:
        y_flat = y_flat[:total]
    return y_flat.reshape(orig_shape)


if __name__ == "__main__":
    key = jax.random.PRNGKey(0)
    # Small conv-style input consistent with CVDD usage: batch=2, channels=4,
    # spatial 16x16 (NCHW).
    x = jax.random.normal(key, (2, 4, 16, 16), dtype=jnp.float32)
    x_host = np.asarray(x)

    # Production (elided) identity path.
    y_fast = base_net_forward(x)

    # Pallas skeleton path — run the kernel once and block on the result.
    y = jax.block_until_ready(base_net_forward_pallas(x))

    assert y.shape == x_host.shape and y.dtype == x_host.dtype
    assert np.array_equal(np.asarray(y), x_host)
    assert np.array_equal(np.asarray(y_fast), x_host)

    print("KERNEL_OK")
</pallas_src>

<mosaic_0001>
module attributes {stable_mosaic.version = 11 : i64} {
  func.func @_identity_copy_kernel(%arg0: i32, %arg1: memref<8x256xf32, #tpu.memory_space<vmem>>, %arg2: memref<8x256xf32, #tpu.memory_space<vmem>>) attributes {dimension_semantics = [#tpu.dimension_semantics<parallel>], iteration_bounds = array<i64: 1>, scalar_prefetch = 0 : i64, scratch_operands = 0 : i64, tpu.core_type = #tpu.core_type<tc>, window_params = [{transform_indices = @transform_0, window_bounds = array<i64: 8, 256>}, {transform_indices = @transform_1, window_bounds = array<i64: 8, 256>}]} {
    %c0 = arith.constant 0 : index
    %c0_0 = arith.constant 0 : index
    %0 = vector.load %arg1[%c0, %c0_0] : memref<8x256xf32, #tpu.memory_space<vmem>>, vector<8x256xf32>
    %c0_1 = arith.constant 0 : index
    %c0_2 = arith.constant 0 : index
    %1 = vector.load %arg2[%c0_1, %c0_2] : memref<8x256xf32, #tpu.memory_space<vmem>>, vector<8x256xf32>
    tpu.vector_store %arg2[%c0_1, %c0_2], %0 {strides = array<i32>} : memref<8x256xf32, #tpu.memory_space<vmem>>, vector<8x256xf32>,
    return
  }
  func.func @transform_0(%arg0: i32) -> (i32, i32) {
    %c0_i32 = arith.constant 0 : i32
    %c0_i32_0 = arith.constant 0 : i32
    return %arg0, %c0_i32 : i32, i32
  }
  func.func @transform_1(%arg0: i32) -> (i32, i32) {
    %c0_i32 = arith.constant 0 : i32
    %c0_i32_0 = arith.constant 0 : i32
    return %arg0, %c0_i32 : i32, i32
  }
}

</mosaic_0001>

<llo_original>
// kernel: base_net_forward_pallas.1
$region0: #{base_net_forward_pallas.1}
  #allocation0 [shape = 'u32[]', space=smem, size = 0x4, offset = 0x4, fixed_abs, tag = 'smem constant byte address 0x4 - core index']
  #allocation1 [shape = 'u32[144,128]{1,0:T(1,128)}', space=vmem, size = 0x12000, scoped, tag = 'internal scratch']
  %s0 = inlined_call_operand.vmem [shape: f32[8,256], index: 0, kind: input, shape index: {}, may-alias: {0,1}]
  %s1 = inlined_call_operand.vmem [shape: f32[8,256], index: 1, kind: output, shape index: {}, may-alias: {0,1}]
  %s2 = sld [smem:[#allocation0]]
  $region14: #{base_net_forward_pallas.1} parent=0
    _
  %s4 = ssub.s32 1, %s2
  %s5 = scalar_select 0, %s4, %s2
  // Predicated region
  $region2: #{base_net_forward_pallas.1} parent=0 // pred_check
    _
  $region3: #{base_net_forward_pallas.1} parent=0 // pred_check_branch
    %7 = sbr.rel (0) target = $region5
  $region4: #{base_net_forward_pallas.1} parent=0 // pred_region
    _
  $region5: #{base_net_forward_pallas.1} parent=0 // pred_fallthru
    _
  %v8 = vld [vmem:[%s0] sm:$0xff]
  %v9 = vld [vmem:[%s0 + $0x8] sm:$0xff]
  %10 = vst [vmem:[%s1] sm:$0xff] %v8
  %11 = vst [vmem:[%s1 + $0x8] sm:$0xff] %v9
  // Predicated region
  $region6: #{base_net_forward_pallas.1} parent=0 // pred_check
    _
  $region7: #{base_net_forward_pallas.1} parent=0 // pred_check_branch
    %13 = sbr.rel (0) target = $region9
  $region8: #{base_net_forward_pallas.1} parent=0 // pred_region
    _
  $region9: #{base_net_forward_pallas.1} parent=0 // pred_fallthru
    _
  // Predicated region
  $region10: #{base_net_forward_pallas.1} parent=0 // pred_check
    _
  $region11: #{base_net_forward_pallas.1} parent=0 // pred_check_branch
    %15 = sbr.rel (0) target = $region13
  $region12: #{base_net_forward_pallas.1} parent=0 // pred_region
    _
  $region13: #{base_net_forward_pallas.1} parent=0 // pred_fallthru
    _

</llo_original>
